<compile_context>
chip_gen: v5e
topology: v5e:2x2
jax: 0.10.0
libtpu: 0.0.40
codegen_flags: <defaults>
</compile_context>

<pallas_src>
import functools

import jax
import jax.numpy as jnp
from jax.experimental import pallas as pl
from jax.experimental.pallas import tpu as pltpu

LN_EPS = 1e-5  # PyTorch nn.LayerNorm default


def _round_up(n, m):
    return ((n + m - 1) // m) * m


def linear_resblock_kernel(x_ref, wt_ref, b_ref, g_ref, beta_ref, o_ref, *, mxu_dtype):
    # MXU operands: cast x tile only if a lower-precision matmul dtype was
    # requested (the weight was already cast once in the wrapper).
    xm = x_ref[...]
    if mxu_dtype is not None:
        xm = xm.astype(mxu_dtype)
    # Linear: x @ W.T + b  (wt_ref already holds W.T), f32 accumulation.
    y = jnp.dot(xm, wt_ref[...], preferred_element_type=jnp.float32)
    y = y + b_ref[...].astype(jnp.float32)                     # (1, D) broadcast

    # LayerNorm over the last dim, in f32.
    mean = jnp.mean(y, axis=-1, keepdims=True)
    var = jnp.mean(jnp.square(y - mean), axis=-1, keepdims=True)
    y_hat = (y - mean) * jax.lax.rsqrt(var + LN_EPS)
    y_hat = y_hat * g_ref[...].astype(jnp.float32) + beta_ref[...].astype(jnp.float32)

    # ReLU + residual add (residual uses the un-cast input tile).
    res = jnp.maximum(y_hat, 0.0)
    o_ref[...] = (x_ref[...].astype(jnp.float32) + res).astype(o_ref.dtype)


def linear_resblock(x, w_t, b, gamma, beta, *, tm=256, mxu_dtype=None):
    """Fused Linear + LayerNorm + ReLU + residual.

    x:      (..., D)
    w_t:    (D, D)  -- the nn.Linear weight ALREADY transposed (in, out) layout;
                       transpose it once at parameter-load time, not per call.
    b, gamma, beta: (D,)
    tm:     row tile (multiple of 8; 256-512 recommended).
    mxu_dtype: optional lower-precision matmul-operand dtype (e.g. jnp.bfloat16);
               accumulation and all LN/ReLU/residual math stay in f32.
    """
    orig_shape = x.shape
    D = orig_shape[-1]
    x2 = x.reshape(-1, D)
    N = x2.shape[0]

    # Row tile: multiple of 8 (sublane), never bigger than the padded problem.
    tm = max(8, min(_round_up(tm, 8), _round_up(N, 8)))
    n_padded = _round_up(N, tm)
    pad = n_padded - N
    if pad:
        x2 = jnp.pad(x2, ((0, pad), (0, 0)))

    if mxu_dtype is not None:
        w_t = w_t.astype(mxu_dtype)   # cast once, outside the kernel

    b2 = b.reshape(1, D)
    g2 = gamma.reshape(1, D)
    be2 = beta.reshape(1, D)

    # Grid-invariant operands: whole array in VMEM, single-buffered.
    resident = pl.BlockSpec(memory_space=pltpu.MemorySpace.VMEM)

    # Explicit VMEM budget: resident params + double-buffered x/out tiles
    # + f32 body intermediates (rough upper bound), floored/capped so the
    # limit is legal on v5e/v6e (128 MiB) and v7x (64 MiB).
    w_bytes = jnp.dtype(w_t.dtype).itemsize
    x_bytes = jnp.dtype(x2.dtype).itemsize
    vmem_est = (D * D * w_bytes + 3 * D * 4
                + 4 * tm * D * x_bytes        # 2 bufs each for x tile and out tile
                + 6 * tm * D * 4)             # f32 temporaries in the body
    vmem_limit = int(min(max(2 * vmem_est, 32 << 20), 64 << 20))

    kernel = functools.partial(linear_resblock_kernel, mxu_dtype=mxu_dtype)

    out = pl.pallas_call(
        kernel,
        out_shape=jax.ShapeDtypeStruct((n_padded, D), x.dtype),
        grid_spec=pltpu.PrefetchScalarGridSpec(
            num_scalar_prefetch=0,
            grid=(n_padded // tm,),
            in_specs=[
                pl.BlockSpec((tm, D), lambda i: (i, 0)),   # x row tile (pipelined)
                resident,                                   # W.T  (resident, 1 buffer)
                resident,                                   # bias
                resident,                                   # LN gamma
                resident,                                   # LN beta
            ],
            out_specs=pl.BlockSpec((tm, D), lambda i: (i, 0)),
        ),
        compiler_params=pltpu.CompilerParams(
            dimension_semantics=("parallel",),             # row axis shards across TCs on v7x
            vmem_limit_bytes=vmem_limit),
    )(x2, w_t, b2, g2, be2)

    if pad:
        out = out[:N]
    return out.reshape(orig_shape)


def linear_resblock_ref(x, W, b, gamma, beta, *, matmul_dtype=None):
    """Pure-JAX reference. W is in PyTorch (out, in) layout."""
    if matmul_dtype is None:
        xm, Wm = x, W
    else:
        xm, Wm = x.astype(matmul_dtype), W.astype(matmul_dtype)
    y = jnp.einsum("...i,oi->...o", xm, Wm,
                   preferred_element_type=jnp.float32) + b
    mean = jnp.mean(y, axis=-1, keepdims=True)
    var = jnp.mean(jnp.square(y - mean), axis=-1, keepdims=True)
    y_hat = (y - mean) / jnp.sqrt(var + LN_EPS)
    y_hat = y_hat * gamma + beta
    return x + jnp.maximum(y_hat, 0.0)


if __name__ == "__main__":
    batch, seq, in_ch = 2, 8, 128   # in_ch = lane dim

    key = jax.random.PRNGKey(0)
    kx, kw, kb = jax.random.split(key, 3)

    x = jax.random.normal(kx, (batch, seq, in_ch), dtype=jnp.float32)

    # Deterministic parameter init (nn.Linear-style uniform; LN defaults).
    bound = 1.0 / (in_ch ** 0.5)
    W_pt = jax.random.uniform(kw, (in_ch, in_ch), jnp.float32, -bound, bound)  # (out, in)
    b = jax.random.uniform(kb, (in_ch,), jnp.float32, -bound, bound)
    gamma = jnp.ones((in_ch,), jnp.float32)
    beta = jnp.zeros((in_ch,), jnp.float32)

    # Pre-transpose ONCE at parameter-load time (kernel consumes W.T directly).
    W_t = jnp.asarray(W_pt.T)

    ref_f32 = linear_resblock_ref(x, W_pt, b, gamma, beta)

    # f32 MXU-operand path (exactness check).
    out_f32 = jax.block_until_ready(linear_resblock(x, W_t, b, gamma, beta))
    assert out_f32.shape == x.shape
    assert jnp.allclose(out_f32, ref_f32, atol=1e-4, rtol=1e-4)

    # bf16 MXU-operand path with f32 accumulation (production-speed config on
    # v6e/v7x); compared against a bf16-operand reference.
    out_bf16 = jax.block_until_ready(
        linear_resblock(x, W_t, b, gamma, beta, mxu_dtype=jnp.bfloat16))
    ref_bf16 = linear_resblock_ref(x, W_pt, b, gamma, beta, matmul_dtype=jnp.bfloat16)
    assert out_bf16.shape == x.shape
    assert jnp.allclose(out_bf16, ref_bf16, atol=2e-3, rtol=2e-3)

    print("KERNEL_OK")
</pallas_src>

<mosaic_0001>
module attributes {stable_mosaic.version = 11 : i64} {
  func.func @linear_resblock_kernel(%arg0: i32, %arg1: memref<16x128xf32, #tpu.memory_space<vmem>>, %arg2: memref<128x128xf32, #tpu.memory_space<vmem>>, %arg3: memref<1x128xf32, #tpu.memory_space<vmem>>, %arg4: memref<1x128xf32, #tpu.memory_space<vmem>>, %arg5: memref<1x128xf32, #tpu.memory_space<vmem>>, %arg6: memref<16x128xf32, #tpu.memory_space<vmem>>) attributes {dimension_semantics = [#tpu.dimension_semantics<parallel>], iteration_bounds = array<i64: 1>, scalar_prefetch = 0 : i64, scratch_operands = 0 : i64, tpu.core_type = #tpu.core_type<tc>, window_params = [{transform_indices = @transform_0, window_bounds = array<i64: 16, 128>}, {pipeline_mode = #tpu.pipeline_mode<synchronous>, transform_indices = @transform_1, window_bounds = array<i64: 128, 128>}, {pipeline_mode = #tpu.pipeline_mode<synchronous>, transform_indices = @transform_2, window_bounds = array<i64: 1, 128>}, {pipeline_mode = #tpu.pipeline_mode<synchronous>, transform_indices = @transform_3, window_bounds = array<i64: 1, 128>}, {pipeline_mode = #tpu.pipeline_mode<synchronous>, transform_indices = @transform_4, window_bounds = array<i64: 1, 128>}, {transform_indices = @transform_5, window_bounds = array<i64: 16, 128>}]} {
    %c0 = arith.constant 0 : index
    %c0_0 = arith.constant 0 : index
    %0 = vector.load %arg1[%c0, %c0_0] : memref<16x128xf32, #tpu.memory_space<vmem>>, vector<16x128xf32>
    %c0_1 = arith.constant 0 : index
    %c0_2 = arith.constant 0 : index
    %1 = vector.load %arg2[%c0_1, %c0_2] : memref<128x128xf32, #tpu.memory_space<vmem>>, vector<128x128xf32>
    %cst = arith.constant dense<0.000000e+00> : vector<16x128xf32>
    %2 = tpu.matmul %0, %1, %cst {dimension_numbers = #tpu.dot_dimension_numbers<[1], [0], [0], [1], [0, 0, 1, 1], [], []>} : vector<16x128xf32>, vector<128x128xf32>, vector<16x128xf32> -> vector<16x128xf32>
    %c0_3 = arith.constant 0 : index
    %c0_4 = arith.constant 0 : index
    %3 = vector.load %arg3[%c0_3, %c0_4] : memref<1x128xf32, #tpu.memory_space<vmem>>, vector<1x128xf32>
    %4 = vector.broadcast %3 : vector<1x128xf32> to vector<16x128xf32>
    %5 = arith.addf %2, %4 : vector<16x128xf32>
    %cst_5 = arith.constant dense<0.000000e+00> : vector<16xf32>
    %6 = vector.multi_reduction <add>, %5, %cst_5 [1] : vector<16x128xf32> to vector<16xf32>
    %7 = vector.shape_cast %6 : vector<16xf32> to vector<16x1xf32>
    %cst_6 = arith.constant 1.280000e+02 : f32
    %8 = vector.broadcast %cst_6 : f32 to vector<16x1xf32>
    %9 = arith.divf %7, %8 : vector<16x1xf32>
    %10 = vector.broadcast %9 : vector<16x1xf32> to vector<16x128xf32>
    %11 = arith.subf %5, %10 : vector<16x128xf32>
    %12 = arith.mulf %11, %11 : vector<16x128xf32>
    %cst_7 = arith.constant dense<0.000000e+00> : vector<16xf32>
    %13 = vector.multi_reduction <add>, %12, %cst_7 [1] : vector<16x128xf32> to vector<16xf32>
    %14 = vector.shape_cast %13 : vector<16xf32> to vector<16x1xf32>
    %cst_8 = arith.constant 1.280000e+02 : f32
    %15 = vector.broadcast %cst_8 : f32 to vector<16x1xf32>
    %16 = arith.divf %14, %15 : vector<16x1xf32>
    %17 = vector.broadcast %9 : vector<16x1xf32> to vector<16x128xf32>
    %18 = arith.subf %5, %17 : vector<16x128xf32>
    %cst_9 = arith.constant 9.99999974E-6 : f32
    %19 = vector.broadcast %cst_9 : f32 to vector<16x1xf32>
    %20 = arith.addf %16, %19 : vector<16x1xf32>
    %21 = math.rsqrt %20 : vector<16x1xf32>
    %22 = vector.broadcast %21 : vector<16x1xf32> to vector<16x128xf32>
    %23 = arith.mulf %18, %22 : vector<16x128xf32>
    %c0_10 = arith.constant 0 : index
    %c0_11 = arith.constant 0 : index
    %24 = vector.load %arg4[%c0_10, %c0_11] : memref<1x128xf32, #tpu.memory_space<vmem>>, vector<1x128xf32>
    %25 = vector.broadcast %24 : vector<1x128xf32> to vector<16x128xf32>
    %26 = arith.mulf %23, %25 : vector<16x128xf32>
    %c0_12 = arith.constant 0 : index
    %c0_13 = arith.constant 0 : index
    %27 = vector.load %arg5[%c0_12, %c0_13] : memref<1x128xf32, #tpu.memory_space<vmem>>, vector<1x128xf32>
    %28 = vector.broadcast %27 : vector<1x128xf32> to vector<16x128xf32>
    %29 = arith.addf %26, %28 : vector<16x128xf32>
    %cst_14 = arith.constant 0.000000e+00 : f32
    %30 = vector.broadcast %cst_14 : f32 to vector<16x128xf32>
    %31 = arith.maximumf %29, %30 : vector<16x128xf32>
    %c0_15 = arith.constant 0 : index
    %c0_16 = arith.constant 0 : index
    %32 = vector.load %arg1[%c0_15, %c0_16] : memref<16x128xf32, #tpu.memory_space<vmem>>, vector<16x128xf32>
    %33 = arith.addf %32, %31 : vector<16x128xf32>
    %c0_17 = arith.constant 0 : index
    %c0_18 = arith.constant 0 : index
    %34 = vector.load %arg6[%c0_17, %c0_18] : memref<16x128xf32, #tpu.memory_space<vmem>>, vector<16x128xf32>
    tpu.vector_store %arg6[%c0_17, %c0_18], %33 {strides = array<i32>} : memref<16x128xf32, #tpu.memory_space<vmem>>, vector<16x128xf32>,
    return
  }
  func.func @transform_0(%arg0: i32) -> (i32, i32) {
    %c0_i32 = arith.constant 0 : i32
    %c0_i32_0 = arith.constant 0 : i32
    return %arg0, %c0_i32 : i32, i32
  }
  func.func @transform_1(%arg0: i32) -> (i32, i32) {
    %c0_i32 = arith.constant 0 : i32
    %c0_i32_0 = arith.constant 0 : i32
    %c0_i32_1 = arith.constant 0 : i32
    return %c0_i32, %c0_i32_0 : i32, i32
  }
  func.func @transform_2(%arg0: i32) -> (i32, i32) {
    %c0_i32 = arith.constant 0 : i32
    %c0_i32_0 = arith.constant 0 : i32
    %c0_i32_1 = arith.constant 0 : i32
    return %c0_i32, %c0_i32_0 : i32, i32
  }
  func.func @transform_3(%arg0: i32) -> (i32, i32) {
    %c0_i32 = arith.constant 0 : i32
    %c0_i32_0 = arith.constant 0 : i32
    %c0_i32_1 = arith.constant 0 : i32
    return %c0_i32, %c0_i32_0 : i32, i32
  }
  func.func @transform_4(%arg0: i32) -> (i32, i32) {
    %c0_i32 = arith.constant 0 : i32
    %c0_i32_0 = arith.constant 0 : i32
    %c0_i32_1 = arith.constant 0 : i32
    return %c0_i32, %c0_i32_0 : i32, i32
  }
  func.func @transform_5(%arg0: i32) -> (i32, i32) {
    %c0_i32 = arith.constant 0 : i32
    %c0_i32_0 = arith.constant 0 : i32
    return %arg0, %c0_i32 : i32, i32
  }
}

</mosaic_0001>

<llo_original>
// kernel: tpu_custom_call.1
$region0: #{tpu_custom_call.1}
  #allocation0 [shape = 'u32[]', space=smem, size = 0x4, offset = 0x4, fixed_abs, tag = 'smem constant byte address 0x4 - core index']
  #allocation1 [shape = 'u32[72,128]{1,0:T(1,128)}', space=vmem, size = 0x9000, scoped, tag = 'internal scratch']
  %s0 = inlined_call_operand.hbm [shape: f32[16,128], index: 0, kind: input, shape index: {}]
  %s1 = inlined_call_operand.hbm [shape: f32[128,128], index: 1, kind: input, shape index: {}]
  %s2 = inlined_call_operand.vmem [shape: f32[1,128], index: 2, kind: input, shape index: {}]
  %s3 = inlined_call_operand.vmem [shape: f32[1,128], index: 3, kind: input, shape index: {}]
  %s4 = inlined_call_operand.vmem [shape: f32[1,128], index: 4, kind: input, shape index: {}]
  %s5 = inlined_call_operand.hbm [shape: f32[16,128], index: 5, kind: output, shape index: {}]
  %s6 = sld [smem:[#allocation0]]
  $region38: #{tpu_custom_call.1} parent=0
    _
  %s8 = ssub.s32 1, %s6
  %s9 = scalar_select 0, %s8, %s6
  $region1: #{tpu_custom_call.1} parent=0
    #allocation2 [shape = 'u8[8192]{0}', space=vmem, size = 0x2000, scoped, tag = 'input window, operand 0, single buffered']
    #allocation3 [shape = 's32[1]{0}', space=sflag, size = 0x4, scoped, tag = 'scoped memory for tpu_custom_call.1']
    #allocation4 [shape = 's32[1]{0}', space=sflag, size = 0x4, scoped, tag = 'scoped memory for tpu_custom_call.1']
    #allocation5 [shape = 'u8[65536]{0}', space=vmem, size = 0x10000, scoped, tag = 'input window, operand 1, single buffered']
    #allocation6 [shape = 's32[1]{0}', space=sflag, size = 0x4, scoped, tag = 'scoped memory for tpu_custom_call.1']
    #allocation7 [shape = 'u8[8192]{0}', space=vmem, size = 0x2000, scoped, tag = 'output window, operand 0, single buffered']
    %10 = vsyncpa [#allocation3], 0
    %11 = vsyncpa [#allocation6], 0
    %12 = vsyncpa [#allocation4], 0
    // Predicated region
    $region2: #{tpu_custom_call.1} parent=1 // pred_check
      _
    $region3: #{tpu_custom_call.1} parent=1 // pred_check_branch
      %14 = sbr.rel (0) target = $region5
    $region4: #{tpu_custom_call.1} parent=1 // pred_region
      %16 = vsyncadd [#allocation3], 0
      %s17 = sshll.u32 %s0, 4
      %s18 = int_to_ptr.hbm [resolvable:$true] %s17
      %s19 = sshll.u32 [#allocation2], 4
      %s20 = int_to_ptr.vmem [resolvable:$true] %s19
      %25 = dma.hbm_to_vmem [thread:$0]  %s18, 256, %s20, [#allocation3], 128, 128, 8
    $region5: #{tpu_custom_call.1} parent=1 // pred_fallthru
      _
    // Predicated region
    $region6: #{tpu_custom_call.1} parent=1 // pred_check
      _
    $region7: #{tpu_custom_call.1} parent=1 // pred_check_branch
      %27 = sbr.rel (0) target = $region9
    $region8: #{tpu_custom_call.1} parent=1 // pred_region
      %29 = vsyncadd [#allocation6], 0
      %s30 = sshll.u32 %s1, 4
      %s31 = int_to_ptr.hbm [resolvable:$true] %s30
      %s32 = sshll.u32 [#allocation5], 4
      %s33 = int_to_ptr.vmem [resolvable:$true] %s32
      %38 = dma.hbm_to_vmem [thread:$0]  %s31, 2048, %s33, [#allocation6], 128, 128, 8
    $region9: #{tpu_custom_call.1} parent=1 // pred_fallthru
      _
    // Predicated region
    $region10: #{tpu_custom_call.1} parent=1 // pred_check
      _
    $region11: #{tpu_custom_call.1} parent=1 // pred_check_branch
      %40 = sbr.rel (0) target = $region13
    $region12: #{tpu_custom_call.1} parent=1 // pred_region
      _
    $region13: #{tpu_custom_call.1} parent=1 // pred_fallthru
      _
    // Predicated region
    $region14: #{tpu_custom_call.1} parent=1 // pred_check
      _
    $region15: #{tpu_custom_call.1} parent=1 // pred_check_branch
      %42 = sbr.rel (0) target = $region17
    $region16: #{tpu_custom_call.1} parent=1 // pred_region
      _
    $region17: #{tpu_custom_call.1} parent=1 // pred_fallthru
      _
    // Predicated region
    $region18: #{tpu_custom_call.1} parent=1 // pred_check
      _
    $region19: #{tpu_custom_call.1} parent=1 // pred_check_branch
      %44 = sbr.rel (0) target = $region21
    $region20: #{tpu_custom_call.1} parent=1 // pred_region
      _
    $region21: #{tpu_custom_call.1} parent=1 // pred_fallthru
      _
    // Predicated region
    $region22: #{tpu_custom_call.1} parent=1 // pred_check
      _
    $region23: #{tpu_custom_call.1} parent=1 // pred_check_branch
      %46 = sbr.rel (0) target = $region25
    $region24: #{tpu_custom_call.1} parent=1 // pred_region
      %48 = dma.done [#allocation3], 256
    $region25: #{tpu_custom_call.1} parent=1 // pred_fallthru
      _
    // Predicated region
    $region26: #{tpu_custom_call.1} parent=1 // pred_check
      _
    $region27: #{tpu_custom_call.1} parent=1 // pred_check_branch
      %50 = sbr.rel (0) target = $region29
    $region28: #{tpu_custom_call.1} parent=1 // pred_region
      %52 = dma.done [#allocation6], 2048
    $region29: #{tpu_custom_call.1} parent=1 // pred_fallthru
      _
    %v53 = vld [vmem:[#allocation2] sm:$0xff]
    %v54 = vld [vmem:[#allocation2 + $0x8] sm:$0xff]
    %v55 = vld [vmem:[#allocation5] sm:$0xff]
    %v56 = vld [vmem:[#allocation5 + $0x8] sm:$0xff]
    %v57 = vld [vmem:[#allocation5 + $0x10] sm:$0xff]
    %v58 = vld [vmem:[#allocation5 + $0x18] sm:$0xff]
    %v59 = vld [vmem:[#allocation5 + $0x20] sm:$0xff]
    %v60 = vld [vmem:[#allocation5 + $0x28] sm:$0xff]
    %v61 = vld [vmem:[#allocation5 + $0x30] sm:$0xff]
    %v62 = vld [vmem:[#allocation5 + $0x38] sm:$0xff]
    %v63 = vld [vmem:[#allocation5 + $0x40] sm:$0xff]
    %v64 = vld [vmem:[#allocation5 + $0x48] sm:$0xff]
    %v65 = vld [vmem:[#allocation5 + $0x50] sm:$0xff]
    %v66 = vld [vmem:[#allocation5 + $0x58] sm:$0xff]
    %v67 = vld [vmem:[#allocation5 + $0x60] sm:$0xff]
    %v68 = vld [vmem:[#allocation5 + $0x68] sm:$0xff]
    %v69 = vld [vmem:[#allocation5 + $0x70] sm:$0xff]
    %v70 = vld [vmem:[#allocation5 + $0x78] sm:$0xff]
    %v71 = vld [vmem:[%s2] sm:$0x1]
    %v73 = vperm.slane %v71, 0
    %75 = vmatpush.msra.mxu0 %v70
    %76 = vmatpush.msra.mxu0 %v69
    %77 = vmatpush.msra.mxu0 %v68
    %78 = vmatpush.msra.mxu0 %v67
    %79 = vmatpush.msra.mxu0 %v66
    %80 = vmatpush.msra.mxu0 %v65
    %81 = vmatpush.msra.mxu0 %v64
    %82 = vmatpush.msra.mxu0 %v63
    %83 = vmatpush.msra.mxu0 %v62
    %84 = vmatpush.msra.mxu0 %v61
    %85 = vmatpush.msra.mxu0 %v60
    %86 = vmatpush.msra.mxu0 %v59
    %87 = vmatpush.msra.mxu0 %v58
    %88 = vmatpush.msra.mxu0 %v57
    %89 = vmatpush.msra.mxu0 %v56
    %90 = vmatpush.msra.mxu0 %v55
    %91 = vmatmul.f32.gmra.mxu0 %v53
    %v92 = vpop.f32.mrf.mxu0
    %v93 = vadd.f32 %v73, %v92
    %94 = vmatmul.f32.gmra.mxu0 %v54
    %v95 = vpop.f32.mrf.mxu0
    %v96 = vadd.f32 %v73, %v95
    %97 = vdwg.mxu0
    %98 = vadd.xlane.f32.xlu0 %v93
    %v99 = vpop.xlane.xlu0 %98
    %100 = vadd.xlane.f32.xlu0 %v96
    %v101 = vpop.xlane.xlu0 %100
    %v102 = vrcp.pop 128.0
    %v103 = vmul.f32 128.0, %v102
    %v104 = vsub.f32 1.0, %v103
    %v105 = vmul.f32 %v102, %v104
    %v106 = vadd.f32 %v102, %v105
    %vm107 = vweird.f32 %v102
    %v108 = vsel %vm107, %v102, %v106
    %v109 = vmul.f32 %v99, %v108
    %v110 = vmul.f32 %v101, %v108
    %v111 = vsub.f32 %v93, %v109
    %v112 = vsub.f32 %v96, %v110
    %v113 = vmul.f32 %v111, %v111
    %v114 = vmul.f32 %v112, %v112
    %115 = vadd.xlane.f32.xlu0 %v113
    %v116 = vpop.xlane.xlu0 %115
    %117 = vadd.xlane.f32.xlu0 %v114
    %v118 = vpop.xlane.xlu0 %117
    %v119 = vmul.f32 %v116, %v108
    %v120 = vmul.f32 %v118, %v108
    %v121 = vadd.f32 %v119, 1e-05
    %v122 = vadd.f32 %v120, 1e-05
    %v123 = vrsqrt.pop %v121
    %v124 = vmul.f32 %v123, %v121
    %v125 = vmul.f32 %v124, %v123
    %v126 = vmul.f32 0.5, %v125
    %v127 = vsub.f32 1.5, %v126
    %v128 = vmul.f32 %v123, %v127
    %vm129 = vweird.f32 %v121
    %vm130 = vweird.f32 %v123
    %vm131 = vmor %vm129, %vm130
    %v132 = vsel %vm131, %v123, %v128
    %v133 = vrsqrt.pop %v122
    %v134 = vmul.f32 %v133, %v122
    %v135 = vmul.f32 %v134, %v133
    %v136 = vmul.f32 0.5, %v135
    %v137 = vsub.f32 1.5, %v136
    %v138 = vmul.f32 %v133, %v137
    %vm139 = vweird.f32 %v122
    %vm140 = vweird.f32 %v133
    %vm141 = vmor %vm139, %vm140
    %v142 = vsel %vm141, %v133, %v138
    %v143 = vmul.f32 %v111, %v132
    %v144 = vmul.f32 %v112, %v142
    %v145 = vld [vmem:[%s3] sm:$0x1]
    %v147 = vperm.slane %v145, 0
    %v149 = vmul.f32 %v143, %v147
    %v150 = vmul.f32 %v144, %v147
    %v151 = vld [vmem:[%s4] sm:$0x1]
    %v153 = vperm.slane %v151, 0
    %v155 = vadd.f32 %v149, %v153
    %v156 = vadd.f32 %v150, %v153
    %v157 = vmax.f32 %v155, 0.0
    %v158 = vmax.f32 %v156, 0.0
    %v159 = vadd.f32 %v53, %v157
    %v160 = vadd.f32 %v54, %v158
    %161 = vst [vmem:[#allocation7] sm:$0xff] %v159
    %162 = vst [vmem:[#allocation7 + $0x8] sm:$0xff] %v160
    // Predicated region
    $region30: #{tpu_custom_call.1} parent=1 // pred_check
      _
    $region31: #{tpu_custom_call.1} parent=1 // pred_check_branch
      %164 = sbr.rel (0) target = $region33
    $region32: #{tpu_custom_call.1} parent=1 // pred_region
      %166 = vsyncadd [#allocation4], 0
      %s167 = sshll.u32 [#allocation7], 4
      %s168 = int_to_ptr.vmem [resolvable:$true] %s167
      %s169 = sshll.u32 %s5, 4
      %s170 = int_to_ptr.hbm [resolvable:$true] %s169
      %175 = dma.vmem_to_hbm [thread:$0]  %s168, 256, %s170, [#allocation4], 128, 128, 8
    $region33: #{tpu_custom_call.1} parent=1 // pred_fallthru
      _
    // Predicated region
    $region34: #{tpu_custom_call.1} parent=1 // pred_check
      _
    $region35: #{tpu_custom_call.1} parent=1 // pred_check_branch
      %177 = sbr.rel (0) target = $region37
    $region36: #{tpu_custom_call.1} parent=1 // pred_region
      %179 = dma.done [#allocation4], 256
    $region37: #{tpu_custom_call.1} parent=1 // pred_fallthru
      _
    %180 = vsyncpa [#allocation3], 1
    %181 = vsyncpa [#allocation6], 1
    %182 = vsyncpa [#allocation4], 1

</llo_original>
